<compile_context>
chip_gen: v5e
topology: v5e:2x2
jax: 0.10.0
libtpu: 0.0.40
codegen_flags: <defaults>
</compile_context>

<pallas_src>
import math
import functools

import jax
import jax.numpy as jnp
from jax.experimental import pallas as pl
from jax.experimental.pallas import tpu as pltpu


# -----------------------------------------------------------------------------
# Per-generation VMEM budget / tile caps
# -----------------------------------------------------------------------------
def _vmem_info():
    phys = 128 * 1024 * 1024
    try:
        info = pltpu.get_tpu_info()
        phys = int(getattr(info, "vmem_capacity_bytes", phys) or phys)
    except Exception:
        pass
    limit = min(int(phys * 3 // 4), 100 * 1024 * 1024)
    return phys, limit


def _device_kind():
    try:
        return jax.devices()[0].device_kind.lower()
    except Exception:
        return ""


_VMEM_PHYS, _VMEM_LIMIT = _vmem_info()
_KIND = _device_kind()

if ("v5 lite" in _KIND) or ("v5e" in _KIND) or ("v5litepod" in _KIND):
    # v5e: 4x128^2 MXU -> 128-aligned modest tiles; scoped default is only
    # 16 MiB so we still set vmem_limit_bytes explicitly.
    _CAPS = dict(tm=256, tn=256, tk=256, tq=128)
elif _VMEM_PHYS < 96 * 1024 * 1024:
    # v7x: only 64 MiB VMEM per TensorCore -> halved tiles.
    _CAPS = dict(tm=256, tn=512, tk=512, tq=128)
else:
    # v6e-class: 128 MiB VMEM, 2x256^2 bf16 MXU -> large 256-multiple tiles.
    _CAPS = dict(tm=512, tn=512, tk=512, tq=256)

# Working-set budget used by the tile-shrinking heuristics (headroom for
# Mosaic internal scratch + double-buffer slack).
_BUDGET = int(_VMEM_LIMIT * 0.6)


def _tile(dim, cap, align):
    """Largest multiple of `align` dividing `dim` and <= cap (full dim if small)."""
    if dim <= cap:
        return dim
    t = (cap // align) * align
    while t >= align:
        if dim % t == 0:
            return t
        t -= align
    # TODO(synk): pad/mask non-divisible dims instead of untiled fallback.
    return dim


def _divisor_tile(dim, cap):
    """Largest divisor of `dim` that is <= cap (no alignment requirement)."""
    if dim <= cap:
        return dim
    for t in range(cap, 0, -1):
        if dim % t == 0:
            return t
    return 1


# -----------------------------------------------------------------------------
# Kernel 1: fused Q/K/V projection (seq-tiled, f32 scratch accumulators)
# -----------------------------------------------------------------------------
def _qkv_body(xq, xk, xv, wq_ref, wk_ref, wv_ref, bq_ref, bk_ref, bv_ref,
              q_ref, k_ref, v_ref, accq, acck, accv):
    kk = pl.program_id(1)  # reduction step over model_dim

    @pl.when(kk == 0)
    def _init():
        accq[...] = jnp.broadcast_to(bq_ref[...], accq.shape)
        acck[...] = jnp.broadcast_to(bk_ref[...], acck.shape)
        accv[...] = jnp.broadcast_to(bv_ref[...], accv.shape)

    accq[...] += jnp.dot(xq, wq_ref[...], preferred_element_type=jnp.float32)
    acck[...] += jnp.dot(xk, wk_ref[...], preferred_element_type=jnp.float32)
    accv[...] += jnp.dot(xv, wv_ref[...], preferred_element_type=jnp.float32)

    @pl.when(kk == pl.num_programs(1) - 1)
    def _done():
        q_ref[...] = accq[...].astype(q_ref.dtype)
        k_ref[...] = acck[...].astype(k_ref.dtype)
        v_ref[...] = accv[...].astype(v_ref.dtype)


def _qkv_kernel(xq_ref, xk_ref, xv_ref, wq_ref, wk_ref, wv_ref,
                bq_ref, bk_ref, bv_ref, q_ref, k_ref, v_ref,
                accq, acck, accv):
    _qkv_body(xq_ref[...].astype(wq_ref.dtype),
              xk_ref[...].astype(wk_ref.dtype),
              xv_ref[...].astype(wv_ref.dtype),
              wq_ref, wk_ref, wv_ref, bq_ref, bk_ref, bv_ref,
              q_ref, k_ref, v_ref, accq, acck, accv)


def _qkv_kernel_shared(x_ref, wq_ref, wk_ref, wv_ref,
                       bq_ref, bk_ref, bv_ref, q_ref, k_ref, v_ref,
                       accq, acck, accv):
    # Self-attention: one activation stream feeds all three projections.
    x = x_ref[...].astype(wq_ref.dtype)
    _qkv_body(x, x, x, wq_ref, wk_ref, wv_ref, bq_ref, bk_ref, bv_ref,
              q_ref, k_ref, v_ref, accq, acck, accv)


def fused_qkv_projection(xq, xk, xv, wq, wk, wv, bq, bk, bv, *, out_dtype,
                         shared_input):
    """xq/xk/xv are flattened (B*S, D); weights are already in compute dtype."""
    M, D = xq.shape
    Nq, Nk, Nv = wq.shape[1], wk.shape[1], wv.shape[1]
    Ntot = Nq + Nk + Nv
    x_bytes = xq.dtype.itemsize
    w_bytes = wq.dtype.itemsize
    o_bytes = jnp.dtype(out_dtype).itemsize
    n_x = 1 if shared_input else 3

    tm = _tile(M, _CAPS["tm"], 8)
    tk = _tile(D, _CAPS["tk"], 128)

    def working_set(tm_, tk_):
        return (2 * n_x * tm_ * tk_ * x_bytes      # activation blocks (2-buffered)
                + 2 * tk_ * Ntot * w_bytes         # weight blocks
                + 2 * tm_ * Ntot * o_bytes         # output blocks
                + tm_ * Ntot * 4)                  # f32 scratch accumulators

    while working_set(tm, tk) > _BUDGET:
        if tk > 128:
            t = _tile(D, max(tk // 2, 128), 128)
            if t < tk:
                tk = t
                continue
        t = _tile(M, max(tm // 2, 8), 8)
        if t < tm:
            tm = t
            continue
        break

    grid = (M // tm, D // tk)

    x_spec = pl.BlockSpec((tm, tk), lambda m, k: (m, k))

    def w_spec(n):
        return pl.BlockSpec((tk, n), lambda m, k: (k, 0))

    def b_spec(n):
        return pl.BlockSpec((1, n), lambda m, k: (0, 0))

    def o_spec(n):
        return pl.BlockSpec((tm, n), lambda m, k: (m, 0))

    if shared_input:
        kernel = _qkv_kernel_shared
        in_specs = [x_spec, w_spec(Nq), w_spec(Nk), w_spec(Nv),
                    b_spec(Nq), b_spec(Nk), b_spec(Nv)]
        args = (xq, wq, wk, wv,
                bq.reshape(1, Nq), bk.reshape(1, Nk), bv.reshape(1, Nv))
    else:
        kernel = _qkv_kernel
        in_specs = [x_spec, x_spec, x_spec,
                    w_spec(Nq), w_spec(Nk), w_spec(Nv),
                    b_spec(Nq), b_spec(Nk), b_spec(Nv)]
        args = (xq, xk, xv, wq, wk, wv,
                bq.reshape(1, Nq), bk.reshape(1, Nk), bv.reshape(1, Nv))

    return pl.pallas_call(
        kernel,
        out_shape=(jax.ShapeDtypeStruct((M, Nq), out_dtype),
                   jax.ShapeDtypeStruct((M, Nk), out_dtype),
                   jax.ShapeDtypeStruct((M, Nv), out_dtype)),
        grid=grid,
        in_specs=in_specs,
        out_specs=(o_spec(Nq), o_spec(Nk), o_spec(Nv)),
        scratch_shapes=[pltpu.VMEM((tm, Nq), jnp.float32),
                        pltpu.VMEM((tm, Nk), jnp.float32),
                        pltpu.VMEM((tm, Nv), jnp.float32)],
        compiler_params=pltpu.CompilerParams(
            dimension_semantics=("parallel", "arbitrary"),
            vmem_limit_bytes=_VMEM_LIMIT),
    )(*args)


# -----------------------------------------------------------------------------
# Kernel 2: scaled dot-product attention (heads + q-rows tiled per grid step)
# -----------------------------------------------------------------------------
def _attn_kernel(q_ref, k_ref, v_ref, o_ref, p_ref, *, scale, compute_dtype,
                 approx_recip):
    # Blocks: q (1,th,tq,Kd), k (1,th,S2,Kd), v (1,th,S2,Vd).
    q = (q_ref[0] * scale).astype(compute_dtype)          # (th, tq, Kd)
    k = k_ref[0].astype(compute_dtype)                    # (th, S2, Kd)

    # Batched MXU matmul; contracting the last dims directly (no k.T / XLU).
    s = jnp.einsum("hqd,hkd->hqk", q, k,
                   preferred_element_type=jnp.float32)    # (th, tq, S2), f32

    # Softmax over the last dim (max-subtracted, stats in f32); exp overwrites
    # s and the reciprocal multiply folds into the probability tensor to keep
    # the number of live (th, tq, S2) f32 temporaries low.
    s = jnp.exp(s - jnp.max(s, axis=-1, keepdims=True))
    p = s * pl.reciprocal(jnp.sum(s, axis=-1, keepdims=True),
                          approx=approx_recip)            # (th, tq, S2), f32

    p_ref[0] = p.astype(p_ref.dtype)                      # bf16 in the bf16 path

    o = jnp.einsum("hqk,hkd->hqd", p.astype(compute_dtype),
                   v_ref[0].astype(compute_dtype),
                   preferred_element_type=jnp.float32)
    o_ref[0] = o.astype(o_ref.dtype)


def scaled_dot_product_attention(q, k, v, key_dim, *, compute_dtype,
                                 probs_dtype, out_dtype):
    """q: (B,H,S1,Kd), k: (B,H,S2,Kd), v: (B,H,S2,Vd)."""
    B, H, S1, Kd = q.shape
    S2 = k.shape[2]
    Vd = v.shape[3]
    scale = 1.0 / math.sqrt(key_dim)
    comp_bytes = jnp.dtype(compute_dtype).itemsize
    probs_bytes = jnp.dtype(probs_dtype).itemsize

    # Head tile: keep the K/V blocks (double-buffered, resident across q tiles)
    # within half of the VMEM budget.
    def kv_bytes(th_):
        return 2 * th_ * S2 * (Kd + Vd) * comp_bytes

    th = H
    while th > 1 and kv_bytes(th) > _BUDGET // 2:
        t = _divisor_tile(H, max(th // 2, 1))
        if t >= th:
            break
        th = t

    # q-row tile: fit the f32 score temporaries + probability output block.
    tq = _tile(S1, _CAPS["tq"], 8)

    def working_set(t):
        return (kv_bytes(th)
                + 2 * th * t * (Kd + Vd) * comp_bytes          # q in + o out blocks
                + th * t * S2 * (2 * 4 + 2 * probs_bytes))     # f32 temps + probs blocks

    while tq > 8 and working_set(tq) > _BUDGET:
        t = _tile(S1, max(tq // 2, 8), 8)
        if t >= tq:
            break
        tq = t

    approx_recip = jnp.dtype(compute_dtype) == jnp.dtype(jnp.bfloat16)
    kernel = functools.partial(_attn_kernel, scale=scale,
                               compute_dtype=compute_dtype,
                               approx_recip=approx_recip)

    out, probs = pl.pallas_call(
        kernel,
        out_shape=(jax.ShapeDtypeStruct((B, H, S1, Vd), out_dtype),
                   jax.ShapeDtypeStruct((B, H, S1, S2), probs_dtype)),
        grid=(B, H // th, S1 // tq),
        in_specs=[
            pl.BlockSpec((1, th, tq, Kd), lambda b, h, qi: (b, h, qi, 0)),
            pl.BlockSpec((1, th, S2, Kd), lambda b, h, qi: (b, h, 0, 0)),
            pl.BlockSpec((1, th, S2, Vd), lambda b, h, qi: (b, h, 0, 0)),
        ],
        out_specs=(
            pl.BlockSpec((1, th, tq, Vd), lambda b, h, qi: (b, h, qi, 0)),
            pl.BlockSpec((1, th, tq, S2), lambda b, h, qi: (b, h, qi, 0)),
        ),
        compiler_params=pltpu.CompilerParams(
            dimension_semantics=("parallel", "parallel", "parallel"),
            vmem_limit_bytes=_VMEM_LIMIT),
    )(q, k, v)
    return out, probs


# -----------------------------------------------------------------------------
# Kernel 3: general tiled linear (output projection / cross-attn QKV fallback)
# -----------------------------------------------------------------------------
def _linear_kernel(x_ref, w_ref, b_ref, o_ref, acc_ref):
    kk = pl.program_id(2)

    @pl.when(kk == 0)
    def _init():
        acc_ref[...] = jnp.broadcast_to(b_ref[...], acc_ref.shape)

    acc_ref[...] += jnp.dot(x_ref[...].astype(w_ref.dtype), w_ref[...],
                            preferred_element_type=jnp.float32)

    @pl.when(kk == pl.num_programs(2) - 1)
    def _done():
        o_ref[...] = acc_ref[...].astype(o_ref.dtype)


def linear(x, w, b, *, out_dtype):
    """y = x @ w + b; `w` is already in the compute dtype."""
    M, K = x.shape
    N = w.shape[1]
    tm = _tile(M, _CAPS["tm"], 8)
    tn = _tile(N, _CAPS["tn"], 128)
    tk = _tile(K, _CAPS["tk"], 128)

    return pl.pallas_call(
        _linear_kernel,
        out_shape=jax.ShapeDtypeStruct((M, N), out_dtype),
        grid=(M // tm, N // tn, K // tk),
        in_specs=[
            pl.BlockSpec((tm, tk), lambda i, j, k: (i, k)),
            pl.BlockSpec((tk, tn), lambda i, j, k: (k, j)),
            pl.BlockSpec((1, tn), lambda i, j, k: (0, j)),
        ],
        out_specs=pl.BlockSpec((tm, tn), lambda i, j, k: (i, j)),
        scratch_shapes=[pltpu.VMEM((tm, tn), jnp.float32)],
        compiler_params=pltpu.CompilerParams(
            dimension_semantics=("parallel", "parallel", "arbitrary"),
            vmem_limit_bytes=_VMEM_LIMIT),
    )(x, w, b.reshape(1, N))


# -----------------------------------------------------------------------------
# MultiHeadAttention forward
# -----------------------------------------------------------------------------
def multi_head_attention(params, query, key, value, *, n_head, key_dim,
                         value_dim, compute_dtype=jnp.float32):
    B, S1, D = query.shape
    S2 = key.shape[1]

    # bf16 path stores the intermediate tensors (Q/K/V, attention output and
    # probabilities) in bf16; f32 path keeps everything f32 for exact parity.
    is_bf16 = jnp.dtype(compute_dtype) == jnp.dtype(jnp.bfloat16)
    inter_dtype = jnp.bfloat16 if is_bf16 else jnp.float32
    probs_dtype = inter_dtype

    # Pre-cast weights once (they are re-streamed per tile inside the
    # kernels); biases stay f32 for the f32 scratch-accumulator init.
    wq = params["Wq"].astype(compute_dtype)
    wk = params["Wk"].astype(compute_dtype)
    wv = params["Wv"].astype(compute_dtype)
    wo = params["Wo"].astype(compute_dtype)
    bq = params["bq"].astype(jnp.float32)
    bk = params["bk"].astype(jnp.float32)
    bv = params["bv"].astype(jnp.float32)
    bo = params["bo"].astype(jnp.float32)

    xq = query.reshape(B * S1, D)
    xk = key.reshape(B * S2, D)
    xv = value.reshape(B * S2, D)

    shared = (query is key) and (key is value)
    if S1 == S2:
        q2d, k2d, v2d = fused_qkv_projection(
            xq, xk, xv, wq, wk, wv, bq, bk, bv,
            out_dtype=inter_dtype, shared_input=shared)
    else:
        # Cross-attention with different sequence lengths: three tiled linears.
        q2d = linear(xq, wq, bq, out_dtype=inter_dtype)
        k2d = linear(xk, wk, bk, out_dtype=inter_dtype)
        v2d = linear(xv, wv, bv, out_dtype=inter_dtype)

    # Replicate torch's `.view(batch, n_head, seq, head_dim)`: plain row-major
    # reshape of the contiguous (B, S, n_head*head_dim) buffer — NO transpose.
    q = q2d.reshape(B, n_head, S1, key_dim)
    k = k2d.reshape(B, n_head, S2, key_dim)
    v = v2d.reshape(B, n_head, S2, value_dim)

    out, attn_scores = scaled_dot_product_attention(
        q, k, v, key_dim, compute_dtype=compute_dtype,
        probs_dtype=probs_dtype, out_dtype=inter_dtype)

    # Replicate `.view(batch, seq, n_head * value_dim)`: row-major reshape.
    out2d = out.reshape(B * S1, n_head * value_dim)

    # Output projection (tiled linear); both dropout layers are identity.
    out2d = linear(out2d, wo, bo, out_dtype=jnp.float32)
    return out2d.reshape(B, S1, D), attn_scores


# -----------------------------------------------------------------------------
# Pure-JAX reference (mirrors the PyTorch forward) for correctness checks
# -----------------------------------------------------------------------------
def reference(params, query, key, value, *, n_head, key_dim, value_dim):
    B, S1, D = query.shape
    S2 = key.shape[1]
    q = (query.reshape(B * S1, D) @ params["Wq"] + params["bq"]).reshape(
        B, n_head, S1, key_dim)
    k = (key.reshape(B * S2, D) @ params["Wk"] + params["bk"]).reshape(
        B, n_head, S2, key_dim)
    v = (value.reshape(B * S2, D) @ params["Wv"] + params["bv"]).reshape(
        B, n_head, S2, value_dim)
    s = jnp.einsum("bhqd,bhkd->bhqk", q / math.sqrt(key_dim), k)
    p = jax.nn.softmax(s, axis=-1)
    o = jnp.einsum("bhqk,bhkd->bhqd", p, v).reshape(B, S1, n_head * value_dim)
    o = (o.reshape(B * S1, -1) @ params["Wo"] + params["bo"]).reshape(B, S1, D)
    return o, p


# -----------------------------------------------------------------------------
def init_params(key, model_dim, n_head, key_dim, value_dim):
    ks = jax.random.split(key, 8)
    sc = 1.0 / math.sqrt(model_dim)
    return {
        "Wq": jax.random.uniform(ks[0], (model_dim, key_dim * n_head), jnp.float32, -sc, sc),
        "bq": jax.random.uniform(ks[1], (key_dim * n_head,), jnp.float32, -sc, sc),
        "Wk": jax.random.uniform(ks[2], (model_dim, key_dim * n_head), jnp.float32, -sc, sc),
        "bk": jax.random.uniform(ks[3], (key_dim * n_head,), jnp.float32, -sc, sc),
        "Wv": jax.random.uniform(ks[4], (model_dim, value_dim * n_head), jnp.float32, -sc, sc),
        "bv": jax.random.uniform(ks[5], (value_dim * n_head,), jnp.float32, -sc, sc),
        "Wo": jax.random.uniform(ks[6], (value_dim * n_head, model_dim), jnp.float32, -sc, sc),
        "bo": jax.random.uniform(ks[7], (model_dim,), jnp.float32, -sc, sc),
    }


if __name__ == "__main__":
    # Small shapes: batch=2, seq=8, model_dim=32, n_head=4, key_dim=value_dim=8
    B, S, D = 2, 8, 32
    n_head, key_dim, value_dim = 4, 8, 8

    root = jax.random.PRNGKey(0)
    kq, kk_, kv_, kp, kc1, kc2 = jax.random.split(root, 6)
    q_in = jax.random.normal(kq, (B, S, D), jnp.float32)
    k_in = jax.random.normal(kk_, (B, S, D), jnp.float32)
    v_in = jax.random.normal(kv_, (B, S, D), jnp.float32)
    params = init_params(kp, D, n_head, key_dim, value_dim)

    ref_out, ref_attn = reference(
        params, q_in, k_in, v_in,
        n_head=n_head, key_dim=key_dim, value_dim=value_dim)

    # --- f32 MXU path: exact parity with the PyTorch/f32 semantics ----------
    out, attn = multi_head_attention(
        params, q_in, k_in, v_in,
        n_head=n_head, key_dim=key_dim, value_dim=value_dim,
        compute_dtype=jnp.float32)
    out = jax.block_until_ready(out)
    attn = jax.block_until_ready(attn)

    assert out.shape == (B, S, D)
    assert attn.shape == (B, n_head, S, S)
    assert jnp.allclose(out, ref_out, atol=1e-4, rtol=1e-4)
    assert jnp.allclose(attn, ref_attn, atol=1e-5, rtol=1e-5)

    # --- bf16 MXU path: bf16 intermediates, f32 softmax/accumulation --------
    out_bf, attn_bf = multi_head_attention(
        params, q_in, k_in, v_in,
        n_head=n_head, key_dim=key_dim, value_dim=value_dim,
        compute_dtype=jnp.bfloat16)
    out_bf = jax.block_until_ready(out_bf)
    attn_bf = jax.block_until_ready(attn_bf)

    assert jnp.allclose(out_bf, ref_out, atol=5e-2, rtol=5e-2)
    assert jnp.allclose(attn_bf.astype(jnp.float32), ref_attn, atol=3e-2, rtol=3e-2)

    # --- self-attention fast path (single activation stream) ----------------
    ref_out_s, ref_attn_s = reference(
        params, q_in, q_in, q_in,
        n_head=n_head, key_dim=key_dim, value_dim=value_dim)
    out_s, attn_s = multi_head_attention(
        params, q_in, q_in, q_in,
        n_head=n_head, key_dim=key_dim, value_dim=value_dim,
        compute_dtype=jnp.float32)
    out_s = jax.block_until_ready(out_s)
    assert jnp.allclose(out_s, ref_out_s, atol=1e-4, rtol=1e-4)
    assert jnp.allclose(attn_s, ref_attn_s, atol=1e-5, rtol=1e-5)

    # --- cross-attention fallback (S1 != S2 -> three tiled linears) ---------
    S2 = 16
    k_long = jax.random.normal(kc1, (B, S2, D), jnp.float32)
    v_long = jax.random.normal(kc2, (B, S2, D), jnp.float32)
    ref_out_c, ref_attn_c = reference(
        params, q_in, k_long, v_long,
        n_head=n_head, key_dim=key_dim, value_dim=value_dim)
    out_c, attn_c = multi_head_attention(
        params, q_in, k_long, v_long,
        n_head=n_head, key_dim=key_dim, value_dim=value_dim,
        compute_dtype=jnp.float32)
    out_c = jax.block_until_ready(out_c)
    assert out_c.shape == (B, S, D)
    assert attn_c.shape == (B, n_head, S, S2)
    assert jnp.allclose(out_c, ref_out_c, atol=1e-4, rtol=1e-4)
    assert jnp.allclose(attn_c, ref_attn_c, atol=1e-5, rtol=1e-5)

    print("KERNEL_OK")
</pallas_src>

<mosaic_0001>
module attributes {stable_mosaic.version = 11 : i64} {
  func.func @_qkv_kernel(%arg0: i32, %arg1: i32, %arg2: memref<16x32xf32, #tpu.memory_space<vmem>>, %arg3: memref<16x32xf32, #tpu.memory_space<vmem>>, %arg4: memref<16x32xf32, #tpu.memory_space<vmem>>, %arg5: memref<32x32xf32, #tpu.memory_space<vmem>>, %arg6: memref<32x32xf32, #tpu.memory_space<vmem>>, %arg7: memref<32x32xf32, #tpu.memory_space<vmem>>, %arg8: memref<1x32xf32, #tpu.memory_space<vmem>>, %arg9: memref<1x32xf32, #tpu.memory_space<vmem>>, %arg10: memref<1x32xf32, #tpu.memory_space<vmem>>, %arg11: memref<16x32xf32, #tpu.memory_space<vmem>>, %arg12: memref<16x32xf32, #tpu.memory_space<vmem>>, %arg13: memref<16x32xf32, #tpu.memory_space<vmem>>, %arg14: memref<16x32xf32, #tpu.memory_space<vmem>>, %arg15: memref<16x32xf32, #tpu.memory_space<vmem>>, %arg16: memref<16x32xf32, #tpu.memory_space<vmem>>) attributes {dimension_semantics = [#tpu.dimension_semantics<parallel>, #tpu.dimension_semantics<arbitrary>], iteration_bounds = array<i64: 1, 1>, scalar_prefetch = 0 : i64, scratch_operands = 3 : i64, tpu.core_type = #tpu.core_type<tc>, window_params = [{transform_indices = @transform_0, window_bounds = array<i64: 16, 32>}, {transform_indices = @transform_1, window_bounds = array<i64: 16, 32>}, {transform_indices = @transform_2, window_bounds = array<i64: 16, 32>}, {transform_indices = @transform_3, window_bounds = array<i64: 32, 32>}, {transform_indices = @transform_4, window_bounds = array<i64: 32, 32>}, {transform_indices = @transform_5, window_bounds = array<i64: 32, 32>}, {pipeline_mode = #tpu.pipeline_mode<synchronous>, transform_indices = @transform_6, window_bounds = array<i64: 1, 32>}, {pipeline_mode = #tpu.pipeline_mode<synchronous>, transform_indices = @transform_7, window_bounds = array<i64: 1, 32>}, {pipeline_mode = #tpu.pipeline_mode<synchronous>, transform_indices = @transform_8, window_bounds = array<i64: 1, 32>}, {transform_indices = @transform_9, window_bounds = array<i64: 16, 32>}, {transform_indices = @transform_10, window_bounds = array<i64: 16, 32>}, {transform_indices = @transform_11, window_bounds = array<i64: 16, 32>}]} {
    %c0 = arith.constant 0 : index
    %c0_0 = arith.constant 0 : index
    %0 = vector.load %arg2[%c0, %c0_0] : memref<16x32xf32, #tpu.memory_space<vmem>>, vector<16x32xf32>
    %c0_1 = arith.constant 0 : index
    %c0_2 = arith.constant 0 : index
    %1 = vector.load %arg3[%c0_1, %c0_2] : memref<16x32xf32, #tpu.memory_space<vmem>>, vector<16x32xf32>
    %c0_3 = arith.constant 0 : index
    %c0_4 = arith.constant 0 : index
    %2 = vector.load %arg4[%c0_3, %c0_4] : memref<16x32xf32, #tpu.memory_space<vmem>>, vector<16x32xf32>
    %c0_i32 = arith.constant 0 : i32
    %3 = arith.cmpi eq, %arg1, %c0_i32 : i32
    %4 = arith.extui %3 : i1 to i32
    %c0_i32_5 = arith.constant 0 : i32
    %5 = arith.cmpi ne, %4, %c0_i32_5 : i32
    scf.if %5 {
      %c0_28 = arith.constant 0 : index
      %c0_29 = arith.constant 0 : index
      %24 = vector.load %arg8[%c0_28, %c0_29] : memref<1x32xf32, #tpu.memory_space<vmem>>, vector<1x32xf32>
      %25 = vector.shape_cast %24 : vector<1x32xf32> to vector<1x32xf32>
      %26 = vector.broadcast %25 : vector<1x32xf32> to vector<16x32xf32>
      %c0_30 = arith.constant 0 : index
      %c0_31 = arith.constant 0 : index
      %27 = vector.load %arg14[%c0_30, %c0_31] : memref<16x32xf32, #tpu.memory_space<vmem>>, vector<16x32xf32>
      tpu.vector_store %arg14[%c0_30, %c0_31], %26 {strides = array<i32>} : memref<16x32xf32, #tpu.memory_space<vmem>>, vector<16x32xf32>,
      %c0_32 = arith.constant 0 : index
      %c0_33 = arith.constant 0 : index
      %28 = vector.load %arg9[%c0_32, %c0_33] : memref<1x32xf32, #tpu.memory_space<vmem>>, vector<1x32xf32>
      %29 = vector.shape_cast %28 : vector<1x32xf32> to vector<1x32xf32>
      %30 = vector.broadcast %29 : vector<1x32xf32> to vector<16x32xf32>
      %c0_34 = arith.constant 0 : index
      %c0_35 = arith.constant 0 : index
      %31 = vector.load %arg15[%c0_34, %c0_35] : memref<16x32xf32, #tpu.memory_space<vmem>>, vector<16x32xf32>
      tpu.vector_store %arg15[%c0_34, %c0_35], %30 {strides = array<i32>} : memref<16x32xf32, #tpu.memory_space<vmem>>, vector<16x32xf32>,
      %c0_36 = arith.constant 0 : index
      %c0_37 = arith.constant 0 : index
      %32 = vector.load %arg10[%c0_36, %c0_37] : memref<1x32xf32, #tpu.memory_space<vmem>>, vector<1x32xf32>
      %33 = vector.shape_cast %32 : vector<1x32xf32> to vector<1x32xf32>
      %34 = vector.broadcast %33 : vector<1x32xf32> to vector<16x32xf32>
      %c0_38 = arith.constant 0 : index
      %c0_39 = arith.constant 0 : index
      %35 = vector.load %arg16[%c0_38, %c0_39] : memref<16x32xf32, #tpu.memory_space<vmem>>, vector<16x32xf32>
      tpu.vector_store %arg16[%c0_38, %c0_39], %34 {strides = array<i32>} : memref<16x32xf32, #tpu.memory_space<vmem>>, vector<16x32xf32>,
    } else {
    }
    %c0_6 = arith.constant 0 : index
    %c0_7 = arith.constant 0 : index
    %6 = vector.load %arg14[%c0_6, %c0_7] : memref<16x32xf32, #tpu.memory_space<vmem>>, vector<16x32xf32>
    %c0_8 = arith.constant 0 : index
    %c0_9 = arith.constant 0 : index
    %7 = vector.load %arg5[%c0_8, %c0_9] : memref<32x32xf32, #tpu.memory_space<vmem>>, vector<32x32xf32>
    %cst = arith.constant dense<0.000000e+00> : vector<16x32xf32>
    %8 = tpu.matmul %0, %7, %cst {dimension_numbers = #tpu.dot_dimension_numbers<[1], [0], [0], [1], [0, 0, 1, 1], [], []>} : vector<16x32xf32>, vector<32x32xf32>, vector<16x32xf32> -> vector<16x32xf32>
    %9 = arith.addf %6, %8 : vector<16x32xf32>
    %c0_10 = arith.constant 0 : index
    %c0_11 = arith.constant 0 : index
    %10 = vector.load %arg14[%c0_10, %c0_11] : memref<16x32xf32, #tpu.memory_space<vmem>>, vector<16x32xf32>
    tpu.vector_store %arg14[%c0_10, %c0_11], %9 {strides = array<i32>} : memref<16x32xf32, #tpu.memory_space<vmem>>, vector<16x32xf32>,
    %c0_12 = arith.constant 0 : index
    %c0_13 = arith.constant 0 : index
    %11 = vector.load %arg15[%c0_12, %c0_13] : memref<16x32xf32, #tpu.memory_space<vmem>>, vector<16x32xf32>
    %c0_14 = arith.constant 0 : index
    %c0_15 = arith.constant 0 : index
    %12 = vector.load %arg6[%c0_14, %c0_15] : memref<32x32xf32, #tpu.memory_space<vmem>>, vector<32x32xf32>
    %cst_16 = arith.constant dense<0.000000e+00> : vector<16x32xf32>
    %13 = tpu.matmul %1, %12, %cst_16 {dimension_numbers = #tpu.dot_dimension_numbers<[1], [0], [0], [1], [0, 0, 1, 1], [], []>} : vector<16x32xf32>, vector<32x32xf32>, vector<16x32xf32> -> vector<16x32xf32>
    %14 = arith.addf %11, %13 : vector<16x32xf32>
    %c0_17 = arith.constant 0 : index
    %c0_18 = arith.constant 0 : index
    %15 = vector.load %arg15[%c0_17, %c0_18] : memref<16x32xf32, #tpu.memory_space<vmem>>, vector<16x32xf32>
    tpu.vector_store %arg15[%c0_17, %c0_18], %14 {strides = array<i32>} : memref<16x32xf32, #tpu.memory_space<vmem>>, vector<16x32xf32>,
    %c0_19 = arith.constant 0 : index
    %c0_20 = arith.constant 0 : index
    %16 = vector.load %arg16[%c0_19, %c0_20] : memref<16x32xf32, #tpu.memory_space<vmem>>, vector<16x32xf32>
    %c0_21 = arith.constant 0 : index
    %c0_22 = arith.constant 0 : index
    %17 = vector.load %arg7[%c0_21, %c0_22] : memref<32x32xf32, #tpu.memory_space<vmem>>, vector<32x32xf32>
    %cst_23 = arith.constant dense<0.000000e+00> : vector<16x32xf32>
    %18 = tpu.matmul %2, %17, %cst_23 {dimension_numbers = #tpu.dot_dimension_numbers<[1], [0], [0], [1], [0, 0, 1, 1], [], []>} : vector<16x32xf32>, vector<32x32xf32>, vector<16x32xf32> -> vector<16x32xf32>
    %19 = arith.addf %16, %18 : vector<16x32xf32>
    %c0_24 = arith.constant 0 : index
    %c0_25 = arith.constant 0 : index
    %20 = vector.load %arg16[%c0_24, %c0_25] : memref<16x32xf32, #tpu.memory_space<vmem>>, vector<16x32xf32>
    tpu.vector_store %arg16[%c0_24, %c0_25], %19 {strides = array<i32>} : memref<16x32xf32, #tpu.memory_space<vmem>>, vector<16x32xf32>,
    %c0_i32_26 = arith.constant 0 : i32
    %21 = arith.cmpi eq, %arg1, %c0_i32_26 : i32
    %22 = arith.extui %21 : i1 to i32
    %c0_i32_27 = arith.constant 0 : i32
    %23 = arith.cmpi ne, %22, %c0_i32_27 : i32
    scf.if %23 {
      %c0_28 = arith.constant 0 : index
      %c0_29 = arith.constant 0 : index
      %24 = vector.load %arg14[%c0_28, %c0_29] : memref<16x32xf32, #tpu.memory_space<vmem>>, vector<16x32xf32>
      %c0_30 = arith.constant 0 : index
      %c0_31 = arith.constant 0 : index
      %25 = vector.load %arg11[%c0_30, %c0_31] : memref<16x32xf32, #tpu.memory_space<vmem>>, vector<16x32xf32>
      tpu.vector_store %arg11[%c0_30, %c0_31], %24 {strides = array<i32>} : memref<16x32xf32, #tpu.memory_space<vmem>>, vector<16x32xf32>,
      %c0_32 = arith.constant 0 : index
      %c0_33 = arith.constant 0 : index
      %26 = vector.load %arg15[%c0_32, %c0_33] : memref<16x32xf32, #tpu.memory_space<vmem>>, vector<16x32xf32>
      %c0_34 = arith.constant 0 : index
      %c0_35 = arith.constant 0 : index
      %27 = vector.load %arg12[%c0_34, %c0_35] : memref<16x32xf32, #tpu.memory_space<vmem>>, vector<16x32xf32>
      tpu.vector_store %arg12[%c0_34, %c0_35], %26 {strides = array<i32>} : memref<16x32xf32, #tpu.memory_space<vmem>>, vector<16x32xf32>,
      %c0_36 = arith.constant 0 : index
      %c0_37 = arith.constant 0 : index
      %28 = vector.load %arg16[%c0_36, %c0_37] : memref<16x32xf32, #tpu.memory_space<vmem>>, vector<16x32xf32>
      %c0_38 = arith.constant 0 : index
      %c0_39 = arith.constant 0 : index
      %29 = vector.load %arg13[%c0_38, %c0_39] : memref<16x32xf32, #tpu.memory_space<vmem>>, vector<16x32xf32>
      tpu.vector_store %arg13[%c0_38, %c0_39], %28 {strides = array<i32>} : memref<16x32xf32, #tpu.memory_space<vmem>>, vector<16x32xf32>,
    } else {
    }
    return
  }
  func.func @transform_0(%arg0: i32, %arg1: i32) -> (i32, i32) {
    %c0_i32 = arith.constant 0 : i32
    return %arg0, %arg1 : i32, i32
  }
  func.func @transform_1(%arg0: i32, %arg1: i32) -> (i32, i32) {
    %c0_i32 = arith.constant 0 : i32
    return %arg0, %arg1 : i32, i32
  }
  func.func @transform_2(%arg0: i32, %arg1: i32) -> (i32, i32) {
    %c0_i32 = arith.constant 0 : i32
    return %arg0, %arg1 : i32, i32
  }
  func.func @transform_3(%arg0: i32, %arg1: i32) -> (i32, i32) {
    %c0_i32 = arith.constant 0 : i32
    %c0_i32_0 = arith.constant 0 : i32
    return %arg1, %c0_i32 : i32, i32
  }
  func.func @transform_4(%arg0: i32, %arg1: i32) -> (i32, i32) {
    %c0_i32 = arith.constant 0 : i32
    %c0_i32_0 = arith.constant 0 : i32
    return %arg1, %c0_i32 : i32, i32
  }
  func.func @transform_5(%arg0: i32, %arg1: i32) -> (i32, i32) {
    %c0_i32 = arith.constant 0 : i32
    %c0_i32_0 = arith.constant 0 : i32
    return %arg1, %c0_i32 : i32, i32
  }
  func.func @transform_6(%arg0: i32, %arg1: i32) -> (i32, i32) {
    %c0_i32 = arith.constant 0 : i32
    %c0_i32_0 = arith.constant 0 : i32
    %c0_i32_1 = arith.constant 0 : i32
    return %c0_i32, %c0_i32_0 : i32, i32
  }
  func.func @transform_7(%arg0: i32, %arg1: i32) -> (i32, i32) {
    %c0_i32 = arith.constant 0 : i32
    %c0_i32_0 = arith.constant 0 : i32
    %c0_i32_1 = arith.constant 0 : i32
    return %c0_i32, %c0_i32_0 : i32, i32
  }
  func.func @transform_8(%arg0: i32, %arg1: i32) -> (i32, i32) {
    %c0_i32 = arith.constant 0 : i32
    %c0_i32_0 = arith.constant 0 : i32
    %c0_i32_1 = arith.constant 0 : i32
    return %c0_i32, %c0_i32_0 : i32, i32
  }
  func.func @transform_9(%arg0: i32, %arg1: i32) -> (i32, i32) {
    %c0_i32 = arith.constant 0 : i32
    %c0_i32_0 = arith.constant 0 : i32
    return %arg0, %c0_i32 : i32, i32
  }
  func.func @transform_10(%arg0: i32, %arg1: i32) -> (i32, i32) {
    %c0_i32 = arith.constant 0 : i32
    %c0_i32_0 = arith.constant 0 : i32
    return %arg0, %c0_i32 : i32, i32
  }
  func.func @transform_11(%arg0: i32, %arg1: i32) -> (i32, i32) {
    %c0_i32 = arith.constant 0 : i32
    %c0_i32_0 = arith.constant 0 : i32
    return %arg0, %c0_i32 : i32, i32
  }
}

</mosaic_0001>

<llo_original>
// kernel: tpu_custom_call.1
$region0: #{tpu_custom_call.1}
  #allocation0 [shape = 'u32[]', space=smem, size = 0x4, offset = 0x4, fixed_abs, tag = 'smem constant byte address 0x4 - core index']
  #allocation1 [shape = 'u32[72,128]{1,0:T(1,128)}', space=vmem, size = 0x9000, scoped, tag = 'internal scratch']
  #allocation2 [shape = 'f32[16,32]{1,0:T(8,128)}', space=vmem, size = 0x2000, scoped, tag = 'scratch operand']
  #allocation3 [shape = 'f32[16,32]{1,0:T(8,128)}', space=vmem, size = 0x2000, scoped, tag = 'scratch operand']
  #allocation4 [shape = 'f32[16,32]{1,0:T(8,128)}', space=vmem, size = 0x2000, scoped, tag = 'scratch operand']
  %s0 = inlined_call_operand.hbm [shape: f32[16,32], index: 0, kind: input, shape index: {}]
  %s1 = inlined_call_operand.hbm [shape: f32[16,32], index: 1, kind: input, shape index: {}]
  %s2 = inlined_call_operand.hbm [shape: f32[16,32], index: 2, kind: input, shape index: {}]
  %s3 = inlined_call_operand.hbm [shape: f32[32,32], index: 3, kind: input, shape index: {}]
  %s4 = inlined_call_operand.hbm [shape: f32[32,32], index: 4, kind: input, shape index: {}]
  %s5 = inlined_call_operand.hbm [shape: f32[32,32], index: 5, kind: input, shape index: {}]
  %s6 = inlined_call_operand.vmem [shape: f32[1,32], index: 6, kind: input, shape index: {}]
  %s7 = inlined_call_operand.vmem [shape: f32[1,32], index: 7, kind: input, shape index: {}]
  %s8 = inlined_call_operand.vmem [shape: f32[1,32], index: 8, kind: input, shape index: {}]
  %s9 = inlined_call_operand.hbm [shape: f32[16,32], index: 9, kind: output, shape index: {0}]
  %s10 = inlined_call_operand.hbm [shape: f32[16,32], index: 10, kind: output, shape index: {1}]
  %s11 = inlined_call_operand.hbm [shape: f32[16,32], index: 11, kind: output, shape index: {2}]
  %12 = xla_tuple %s9, %s10, %s11
  %s13 = sld [smem:[#allocation0]]
  $region94: #{tpu_custom_call.1} parent=0
    _
  %s15 = ssub.s32 1, %s13
  %s16 = scalar_select 0, %s15, %s13
  $region1: #{tpu_custom_call.1} parent=0
    #allocation5 [shape = 'u8[8192]{0}', space=vmem, size = 0x2000, scoped, tag = 'input window, operand 0, single buffered']
    #allocation6 [shape = 's32[1]{0}', space=sflag, size = 0x4, scoped, tag = 'scoped memory for tpu_custom_call.1']
    #allocation7 [shape = 's32[1]{0}', space=sflag, size = 0x4, scoped, tag = 'scoped memory for tpu_custom_call.1']
    #allocation8 [shape = 'u8[8192]{0}', space=vmem, size = 0x2000, scoped, tag = 'input window, operand 1, single buffered']
    #allocation9 [shape = 's32[1]{0}', space=sflag, size = 0x4, scoped, tag = 'scoped memory for tpu_custom_call.1']
    #allocation10 [shape = 'u8[8192]{0}', space=vmem, size = 0x2000, scoped, tag = 'input window, operand 2, single buffered']
    #allocation11 [shape = 'u8[16384]{0}', space=vmem, size = 0x4000, scoped, tag = 'input window, operand 3, single buffered']
    #allocation12 [shape = 's32[1]{0}', space=sflag, size = 0x4, scoped, tag = 'scoped memory for tpu_custom_call.1']
    #allocation13 [shape = 'u8[16384]{0}', space=vmem, size = 0x4000, scoped, tag = 'input window, operand 4, single buffered']
    #allocation14 [shape = 'u8[16384]{0}', space=vmem, size = 0x4000, scoped, tag = 'input window, operand 5, single buffered']
    #allocation15 [shape = 's32[1]{0}', space=sflag, size = 0x4, scoped, tag = 'scoped memory for tpu_custom_call.1']
    #allocation16 [shape = 'u8[8192]{0}', space=vmem, size = 0x2000, scoped, tag = 'output window, operand 0, single buffered']
    #allocation17 [shape = 'u8[8192]{0}', space=vmem, size = 0x2000, scoped, tag = 'output window, operand 1, single buffered']
    #allocation18 [shape = 's32[1]{0}', space=sflag, size = 0x4, scoped, tag = 'scoped memory for tpu_custom_call.1']
    #allocation19 [shape = 'u8[8192]{0}', space=vmem, size = 0x2000, scoped, tag = 'output window, operand 2, single buffered']
    %17 = vsyncpa [#allocation6], 0
    %18 = vsyncpa [#allocation9], 0
    %19 = vsyncpa [#allocation12], 0
    %20 = vsyncpa [#allocation15], 0
    %21 = vsyncpa [#allocation7], 0
    %22 = vsyncpa [#allocation18], 0
    // Predicated region
    $region2: #{tpu_custom_call.1} parent=1 // pred_check
      _
    $region3: #{tpu_custom_call.1} parent=1 // pred_check_branch
      %24 = sbr.rel (0) target = $region5
    $region4: #{tpu_custom_call.1} parent=1 // pred_region
      %26 = vsyncadd [#allocation6], 0
      %s27 = sshll.u32 %s0, 4
      %s28 = int_to_ptr.hbm [resolvable:$true] %s27
      %s29 = sshll.u32 [#allocation5], 4
      %s30 = int_to_ptr.vmem [resolvable:$true] %s29
      %35 = dma.hbm_to_vmem [thread:$0]  %s28, 256, %s30, [#allocation6], 128, 128, 8
    $region5: #{tpu_custom_call.1} parent=1 // pred_fallthru
      _
    // Predicated region
    $region6: #{tpu_custom_call.1} parent=1 // pred_check
      _
    $region7: #{tpu_custom_call.1} parent=1 // pred_check_branch
      %37 = sbr.rel (0) target = $region9
    $region8: #{tpu_custom_call.1} parent=1 // pred_region
      %39 = vsyncadd [#allocation9], 0
      %s40 = sshll.u32 %s1, 4
      %s41 = int_to_ptr.hbm [resolvable:$true] %s40
      %s42 = sshll.u32 [#allocation8], 4
      %s43 = int_to_ptr.vmem [resolvable:$true] %s42
      %48 = dma.hbm_to_vmem [thread:$0]  %s41, 256, %s43, [#allocation9], 128, 128, 8
    $region9: #{tpu_custom_call.1} parent=1 // pred_fallthru
      _
    // Predicated region
    $region10: #{tpu_custom_call.1} parent=1 // pred_check
      _
    $region11: #{tpu_custom_call.1} parent=1 // pred_check_branch
      %50 = sbr.rel (0) target = $region13
    $region12: #{tpu_custom_call.1} parent=1 // pred_region
      %52 = vsyncadd [#allocation9], 0
      %s53 = sshll.u32 %s2, 4
      %s54 = int_to_ptr.hbm [resolvable:$true] %s53
      %s55 = sshll.u32 [#allocation10], 4
      %s56 = int_to_ptr.vmem [resolvable:$true] %s55
      %61 = dma.hbm_to_vmem [thread:$0]  %s54, 256, %s56, [#allocation9], 128, 128, 8
    $region13: #{tpu_custom_call.1} parent=1 // pred_fallthru
      _
    // Predicated region
    $region14: #{tpu_custom_call.1} parent=1 // pred_check
      _
    $region15: #{tpu_custom_call.1} parent=1 // pred_check_branch
      %63 = sbr.rel (0) target = $region17
    $region16: #{tpu_custom_call.1} parent=1 // pred_region
      %65 = vsyncadd [#allocation12], 0
      %s66 = sshll.u32 %s3, 4
      %s67 = int_to_ptr.hbm [resolvable:$true] %s66
      %s68 = sshll.u32 [#allocation11], 4
      %s69 = int_to_ptr.vmem [resolvable:$true] %s68
      %74 = dma.hbm_to_vmem [thread:$0]  %s67, 512, %s69, [#allocation12], 128, 128, 8
    $region17: #{tpu_custom_call.1} parent=1 // pred_fallthru
      _
    // Predicated region
    $region18: #{tpu_custom_call.1} parent=1 // pred_check
      _
    $region19: #{tpu_custom_call.1} parent=1 // pred_check_branch
      %76 = sbr.rel (0) target = $region21
    $region20: #{tpu_custom_call.1} parent=1 // pred_region
      %78 = vsyncadd [#allocation12], 0
      %s79 = sshll.u32 %s4, 4
      %s80 = int_to_ptr.hbm [resolvable:$true] %s79
      %s81 = sshll.u32 [#allocation13], 4
      %s82 = int_to_ptr.vmem [resolvable:$true] %s81
      %87 = dma.hbm_to_vmem [thread:$0]  %s80, 512, %s82, [#allocation12], 128, 128, 8
    $region21: #{tpu_custom_call.1} parent=1 // pred_fallthru
      _
    // Predicated region
    $region22: #{tpu_custom_call.1} parent=1 // pred_check
      _
    $region23: #{tpu_custom_call.1} parent=1 // pred_check_branch
      %89 = sbr.rel (0) target = $region25
    $region24: #{tpu_custom_call.1} parent=1 // pred_region
      %91 = vsyncadd [#allocation15], 0
      %s92 = sshll.u32 %s5, 4
      %s93 = int_to_ptr.hbm [resolvable:$true] %s92
      %s94 = sshll.u32 [#allocation14], 4
      %s95 = int_to_ptr.vmem [resolvable:$true] %s94
      %100 = dma.hbm_to_vmem [thread:$0]  %s93, 512, %s95, [#allocation15], 128, 128, 8
    $region25: #{tpu_custom_call.1} parent=1 // pred_fallthru
      _
    // Predicated region
    $region26: #{tpu_custom_call.1} parent=1 // pred_check
      _
    $region27: #{tpu_custom_call.1} parent=1 // pred_check_branch
      %102 = sbr.rel (0) target = $region29
    $region28: #{tpu_custom_call.1} parent=1 // pred_region
      _
    $region29: #{tpu_custom_call.1} parent=1 // pred_fallthru
      _
    // Predicated region
    $region30: #{tpu_custom_call.1} parent=1 // pred_check
      _
    $region31: #{tpu_custom_call.1} parent=1 // pred_check_branch
      %104 = sbr.rel (0) target = $region33
    $region32: #{tpu_custom_call.1} parent=1 // pred_region
      _
    $region33: #{tpu_custom_call.1} parent=1 // pred_fallthru
      _
    // Predicated region
    $region34: #{tpu_custom_call.1} parent=1 // pred_check
      _
    $region35: #{tpu_custom_call.1} parent=1 // pred_check_branch
      %106 = sbr.rel (0) target = $region37
    $region36: #{tpu_custom_call.1} parent=1 // pred_region
      _
    $region37: #{tpu_custom_call.1} parent=1 // pred_fallthru
      _
    // Predicated region
    $region38: #{tpu_custom_call.1} parent=1 // pred_check
      _
    $region39: #{tpu_custom_call.1} parent=1 // pred_check_branch
      %108 = sbr.rel (0) target = $region41
    $region40: #{tpu_custom_call.1} parent=1 // pred_region
      %110 = dma.done [#allocation6], 256
    $region41: #{tpu_custom_call.1} parent=1 // pred_fallthru
      _
    // Predicated region
    $region42: #{tpu_custom_call.1} parent=1 // pred_check
      _
    $region43: #{tpu_custom_call.1} parent=1 // pred_check_branch
      %112 = sbr.rel (0) target = $region45
    $region44: #{tpu_custom_call.1} parent=1 // pred_region
      %114 = dma.done [#allocation9], 256
    $region45: #{tpu_custom_call.1} parent=1 // pred_fallthru
      _
    // Predicated region
    $region46: #{tpu_custom_call.1} parent=1 // pred_check
      _
    $region47: #{tpu_custom_call.1} parent=1 // pred_check_branch
      %116 = sbr.rel (0) target = $region49
    $region48: #{tpu_custom_call.1} parent=1 // pred_region
      %118 = dma.done [#allocation9], 256
    $region49: #{tpu_custom_call.1} parent=1 // pred_fallthru
      _
    // Predicated region
    $region50: #{tpu_custom_call.1} parent=1 // pred_check
      _
    $region51: #{tpu_custom_call.1} parent=1 // pred_check_branch
      %120 = sbr.rel (0) target = $region53
    $region52: #{tpu_custom_call.1} parent=1 // pred_region
      %122 = dma.done [#allocation12], 512
    $region53: #{tpu_custom_call.1} parent=1 // pred_fallthru
      _
    // Predicated region
    $region54: #{tpu_custom_call.1} parent=1 // pred_check
      _
    $region55: #{tpu_custom_call.1} parent=1 // pred_check_branch
      %124 = sbr.rel (0) target = $region57
    $region56: #{tpu_custom_call.1} parent=1 // pred_region
      %126 = dma.done [#allocation12], 512
    $region57: #{tpu_custom_call.1} parent=1 // pred_fallthru
      _
    // Predicated region
    $region58: #{tpu_custom_call.1} parent=1 // pred_check
      _
    $region59: #{tpu_custom_call.1} parent=1 // pred_check_branch
      %128 = sbr.rel (0) target = $region61
    $region60: #{tpu_custom_call.1} parent=1 // pred_region
      %130 = dma.done [#allocation15], 512
    $region61: #{tpu_custom_call.1} parent=1 // pred_fallthru
      _
    %v131 = vld [vmem:[#allocation5] sm:$0xff]
    %v132 = vld [vmem:[#allocation5 + $0x8] sm:$0xff]
    %v133 = vld [vmem:[#allocation8] sm:$0xff]
    %v134 = vld [vmem:[#allocation8 + $0x8] sm:$0xff]
    %v135 = vld [vmem:[#allocation10] sm:$0xff]
    %v136 = vld [vmem:[#allocation10 + $0x8] sm:$0xff]
    %p137 = scmp.eq.s32.totalorder 0, 0
    // Predicated region
    $region62: #{tpu_custom_call.1} parent=1 // pred_check
      %p138 = pneg %p137
    $region63: #{tpu_custom_call.1} parent=1 // pred_check_branch
      %140 = sbr.rel (%p138) target = $region65
    $region64: #{tpu_custom_call.1} parent=1 // pred_region
      %v141 = vld [vmem:[%s6] sm:$0x1]
      %v143 = vperm.slane %v141, 0
      %vm145 = vcmask 261120
      %146 = vst.msk [vmem:[#allocation2] sm:$0xff] %vm145, %v143
      %147 = vst.msk [vmem:[#allocation2 + $0x8] sm:$0xff] %vm145, %v143
      %v148 = vld [vmem:[%s7] sm:$0x1]
      %v150 = vperm.slane %v148, 0
      %152 = vst.msk [vmem:[#allocation3] sm:$0xff] %vm145, %v150
      %153 = vst.msk [vmem:[#allocation3 + $0x8] sm:$0xff] %vm145, %v150
      %v154 = vld [vmem:[%s8] sm:$0x1]
      %v156 = vperm.slane %v154, 0
      %158 = vst.msk [vmem:[#allocation4] sm:$0xff] %vm145, %v156
      %159 = vst.msk [vmem:[#allocation4 + $0x8] sm:$0xff] %vm145, %v156
    $region65: #{tpu_custom_call.1} parent=1 // pred_fallthru
      _
    %v160 = vld [vmem:[#allocation2] sm:$0xff]
    %v161 = vld [vmem:[#allocation2 + $0x8] sm:$0xff]
    %v162 = vld [vmem:[#allocation11] sm:$0xff]
    %v163 = vld [vmem:[#allocation11 + $0x8] sm:$0xff]
    %v164 = vld [vmem:[#allocation11 + $0x10] sm:$0xff]
    %v165 = vld [vmem:[#allocation11 + $0x18] sm:$0xff]
    %vm166 = vcmask 261120
    %v168 = vsel %vm166, %v131, 0
    %v171 = vsel %vm166, %v132, 0
    %173 = vmatpush.msra.mxu0 0.0
    %174 = vmatpush.msra.mxu0 0.0
    %175 = vmatpush.msra.mxu0 0.0
    %176 = vmatpush.msra.mxu0 0.0
    %177 = vmatpush.msra.mxu0 0.0
    %178 = vmatpush.msra.mxu0 0.0
    %179 = vmatpush.msra.mxu0 0.0
    %180 = vmatpush.msra.mxu0 0.0
    %181 = vmatpush.msra.mxu0 0.0
    %182 = vmatpush.msra.mxu0 0.0
    %183 = vmatpush.msra.mxu0 0.0
    %184 = vmatpush.msra.mxu0 0.0
    %185 = vmatpush.msra.mxu0 %v165
    %186 = vmatpush.msra.mxu0 %v164
    %187 = vmatpush.msra.mxu0 %v163
    %188 = vmatpush.msra.mxu0 %v162
    %189 = vmatmul.f32.gmra.mxu0 %v168
    %v190 = vpop.f32.mrf.mxu0
    %v191 = vadd.f32 0.0, %v190
    %192 = vmatmul.f32.gmra.mxu0 %v171
    %v193 = vpop.f32.mrf.mxu0
    %v194 = vadd.f32 0.0, %v193
    %195 = vdwg.mxu0
    %v196 = vadd.f32 %v160, %v191
    %v197 = vadd.f32 %v161, %v194
    %198 = vst.msk [vmem:[#allocation2] sm:$0xff] %vm166, %v196
    %199 = vst.msk [vmem:[#allocation2 + $0x8] sm:$0xff] %vm166, %v197
    %v200 = vld [vmem:[#allocation3] sm:$0xff]
    %v201 = vld [vmem:[#allocation3 + $0x8] sm:$0xff]
    %v202 = vld [vmem:[#allocation13] sm:$0xff]
    %v203 = vld [vmem:[#allocation13 + $0x8] sm:$0xff]
    %v204 = vld [vmem:[#allocation13 + $0x10] sm:$0xff]
    %v205 = vld [vmem:[#allocation13 + $0x18] sm:$0xff]
    %v207 = vsel %vm166, %v133, 0
    %v210 = vsel %vm166, %v134, 0
    %212 = vmatpush.msra.mxu0 0.0
    %213 = vmatpush.msra.mxu0 0.0
    %214 = vmatpush.msra.mxu0 0.0
    %215 = vmatpush.msra.mxu0 0.0
    %216 = vmatpush.msra.mxu0 0.0
    %217 = vmatpush.msra.mxu0 0.0
    %218 = vmatpush.msra.mxu0 0.0
    %219 = vmatpush.msra.mxu0 0.0
    %220 = vmatpush.msra.mxu0 0.0
    %221 = vmatpush.msra.mxu0 0.0
    %222 = vmatpush.msra.mxu0 0.0
    %223 = vmatpush.msra.mxu0 0.0
    %224 = vmatpush.msra.mxu0 %v205
    %225 = vmatpush.msra.mxu0 %v204
    %226 = vmatpush.msra.mxu0 %v203
    %227 = vmatpush.msra.mxu0 %v202
    %228 = vmatmul.f32.gmra.mxu0 %v207
    %v229 = vpop.f32.mrf.mxu0
    %v230 = vadd.f32 0.0, %v229
    %231 = vmatmul.f32.gmra.mxu0 %v210
    %v232 = vpop.f32.mrf.mxu0
    %v233 = vadd.f32 0.0, %v232
    %234 = vdwg.mxu0
    %v235 = vadd.f32 %v200, %v230
    %v236 = vadd.f32 %v201, %v233
    %237 = vst.msk [vmem:[#allocation3] sm:$0xff] %vm166, %v235
    %238 = vst.msk [vmem:[#allocation3 + $0x8] sm:$0xff] %vm166, %v236
    %v239 = vld [vmem:[#allocation4] sm:$0xff]
    %v240 = vld [vmem:[#allocation4 + $0x8] sm:$0xff]
    %v241 = vld [vmem:[#allocation14] sm:$0xff]
    %v242 = vld [vmem:[#allocation14 + $0x8] sm:$0xff]
    %v243 = vld [vmem:[#allocation14 + $0x10] sm:$0xff]
    %v244 = vld [vmem:[#allocation14 + $0x18] sm:$0xff]
    %v246 = vsel %vm166, %v135, 0
    %v249 = vsel %vm166, %v136, 0
    %251 = vmatpush.msra.mxu0 0.0
    %252 = vmatpush.msra.mxu0 0.0
    %253 = vmatpush.msra.mxu0 0.0
    %254 = vmatpush.msra.mxu0 0.0
    %255 = vmatpush.msra.mxu0 0.0
    %256 = vmatpush.msra.mxu0 0.0
    %257 = vmatpush.msra.mxu0 0.0
    %258 = vmatpush.msra.mxu0 0.0
    %259 = vmatpush.msra.mxu0 0.0
    %260 = vmatpush.msra.mxu0 0.0
    %261 = vmatpush.msra.mxu0 0.0
    %262 = vmatpush.msra.mxu0 0.0
    %263 = vmatpush.msra.mxu0 %v244
    %264 = vmatpush.msra.mxu0 %v243
    %265 = vmatpush.msra.mxu0 %v242
    %266 = vmatpush.msra.mxu0 %v241
    %267 = vmatmul.f32.gmra.mxu0 %v246
    %v268 = vpop.f32.mrf.mxu0
    %v269 = vadd.f32 0.0, %v268
    %270 = vmatmul.f32.gmra.mxu0 %v249
    %v271 = vpop.f32.mrf.mxu0
    %v272 = vadd.f32 0.0, %v271
    %273 = vdwg.mxu0
    %v274 = vadd.f32 %v239, %v269
    %v275 = vadd.f32 %v240, %v272
    %276 = vst.msk [vmem:[#allocation4] sm:$0xff] %vm166, %v274
    %277 = vst.msk [vmem:[#allocation4 + $0x8] sm:$0xff] %vm166, %v275
    // Predicated region
    $region66: #{tpu_custom_call.1} parent=1 // pred_check
      %p278 = pneg %p137
    $region67: #{tpu_custom_call.1} parent=1 // pred_check_branch
      %280 = sbr.rel (%p278) target = $region69
    $region68: #{tpu_custom_call.1} parent=1 // pred_region
      %v281 = vld [vmem:[#allocation2] sm:$0xff]
      %v282 = vld [vmem:[#allocation2 + $0x8] sm:$0xff]
      %283 = vst.msk [vmem:[#allocation16] sm:$0xff] %vm166, %v281
      %284 = vst.msk [vmem:[#allocation16 + $0x8] sm:$0xff] %vm166, %v282
      %v285 = vld [vmem:[#allocation3] sm:$0xff]
      %v286 = vld [vmem:[#allocation3 + $0x8] sm:$0xff]
      %287 = vst.msk [vmem:[#allocation17] sm:$0xff] %vm166, %v285
      %288 = vst.msk [vmem:[#allocation17 + $0x8] sm:$0xff] %vm166, %v286
      %v289 = vld [vmem:[#allocation4] sm:$0xff]
      %v290 = vld [vmem:[#allocation4 + $0x8] sm:$0xff]
      %291 = vst.msk [vmem:[#allocation19] sm:$0xff] %vm166, %v289
      %292 = vst.msk [vmem:[#allocation19 + $0x8] sm:$0xff] %vm166, %v290
    $region69: #{tpu_custom_call.1} parent=1 // pred_fallthru
      _
    // Predicated region
    $region70: #{tpu_custom_call.1} parent=1 // pred_check
      _
    $region71: #{tpu_custom_call.1} parent=1 // pred_check_branch
      %294 = sbr.rel (0) target = $region73
    $region72: #{tpu_custom_call.1} parent=1 // pred_region
      %296 = vsyncadd [#allocation7], 0
      %s297 = sshll.u32 [#allocation16], 4
      %s298 = int_to_ptr.vmem [resolvable:$true] %s297
      %s299 = sshll.u32 %s9, 4
      %s300 = int_to_ptr.hbm [resolvable:$true] %s299
      %305 = dma.vmem_to_hbm [thread:$0]  %s298, 256, %s300, [#allocation7], 128, 128, 8
    $region73: #{tpu_custom_call.1} parent=1 // pred_fallthru
      _
    // Predicated region
    $region74: #{tpu_custom_call.1} parent=1 // pred_check
      _
    $region75: #{tpu_custom_call.1} parent=1 // pred_check_branch
      %307 = sbr.rel (0) target = $region77
    $region76: #{tpu_custom_call.1} parent=1 // pred_region
      %309 = vsyncadd [#allocation18], 0
      %s310 = sshll.u32 [#allocation17], 4
      %s311 = int_to_ptr.vmem [resolvable:$true] %s310
      %s312 = sshll.u32 %s10, 4
      %s313 = int_to_ptr.hbm [resolvable:$true] %s312
      %318 = dma.vmem_to_hbm [thread:$0]  %s311, 256, %s313, [#allocation18], 128, 128, 8
    $region77: #{tpu_custom_call.1} parent=1 // pred_fallthru
      _
    // Predicated region
    $region78: #{tpu_custom_call.1} parent=1 // pred_check
      _
    $region79: #{tpu_custom_call.1} parent=1 // pred_check_branch
      %320 = sbr.rel (0) target = $region81
    $region80: #{tpu_custom_call.1} parent=1 // pred_region
      %322 = vsyncadd [#allocation18], 0
      %s323 = sshll.u32 [#allocation19], 4
      %s324 = int_to_ptr.vmem [resolvable:$true] %s323
      %s325 = sshll.u32 %s11, 4
      %s326 = int_to_ptr.hbm [resolvable:$true] %s325
      %331 = dma.vmem_to_hbm [thread:$0]  %s324, 256, %s326, [#allocation18], 128, 128, 8
    $region81: #{tpu_custom_call.1} parent=1 // pred_fallthru
      _
    // Predicated region
    $region82: #{tpu_custom_call.1} parent=1 // pred_check
      _
    $region83: #{tpu_custom_call.1} parent=1 // pred_check_branch
      %333 = sbr.rel (0) target = $region85
    $region84: #{tpu_custom_call.1} parent=1 // pred_region
      %335 = dma.done [#allocation7], 256
    $region85: #{tpu_custom_call.1} parent=1 // pred_fallthru
      _
    // Predicated region
    $region86: #{tpu_custom_call.1} parent=1 // pred_check
      _
    $region87: #{tpu_custom_call.1} parent=1 // pred_check_branch
      %337 = sbr.rel (0) target = $region89
    $region88: #{tpu_custom_call.1} parent=1 // pred_region
      %339 = dma.done [#allocation18], 256
    $region89: #{tpu_custom_call.1} parent=1 // pred_fallthru
      _
    // Predicated region
    $region90: #{tpu_custom_call.1} parent=1 // pred_check
      _
    $region91: #{tpu_custom_call.1} parent=1 // pred_check_branch
      %341 = sbr.rel (0) target = $region93
    $region92: #{tpu_custom_call.1} parent=1 // pred_region
      %343 = dma.done [#allocation18], 256
    $region93: #{tpu_custom_call.1} parent=1 // pred_fallthru
      _
    %344 = vsyncpa [#allocation6], 1
    %345 = vsyncpa [#allocation9], 1
    %346 = vsyncpa [#allocation12], 1
    %347 = vsyncpa [#allocation15], 1
    %348 = vsyncpa [#allocation7], 1
    %349 = vsyncpa [#allocation18], 1

</llo_original>
